<compile_context>
chip_gen: v6e
topology: v6e:2x2x1
jax: 0.10.0
libtpu: 0.0.40
codegen_flags: <defaults>
</compile_context>

<pallas_src>
import jax
import jax.numpy as jnp
from jax.experimental import pallas as pl
from jax.experimental.pallas import tpu as pltpu

C = 4                       # number of classes (PyTorch default C=4)
D = 5 + C                   # per-cell feature width: [obj, x, y, w, h, classes...]

LAMBDA_NO_OBJ = 1.3
LAMBDA_OBJ = 1.0
LAMBDA_CLASS = 1.0
LAMBDA_BB_CORD = 8.0

NUM_CHUNKS = 2              # outer "parallel" grid axis (2 TCs on v7x)
MAX_TILE_N = 8192           # cells (lanes) per grid step; (9, 8192) f32 ~= 288 KiB/block


def _round_up(x, m):
    return ((x + m - 1) // m) * m


def _bce_with_logits(x, y):
    # Numerically stable BCEWithLogits: max(x,0) - x*y + log(1 + exp(-|x|))
    return jnp.maximum(x, 0.0) - x * y + jnp.log(1.0 + jnp.exp(-jnp.abs(x)))


def yolo_loss_kernel(pred_ref, gt_ref, out_ref):
    """pred_ref / gt_ref: (D, TILE_N) channel-major blocks.
    out_ref: (1, 8, TILE_N) partial-sum accumulator, VMEM-resident across the
    inner (reduction) grid axis; sublanes 0..5 hold the six loss sums."""
    i = pl.program_id(1)

    @pl.when(i == 0)
    def _():
        out_ref[...] = jnp.zeros_like(out_ref)

    pred = pred_ref[...].astype(jnp.float32)     # (D, T)
    gt = gt_ref[...].astype(jnp.float32)         # (D, T)

    gt_obj = gt[0:1, :]                          # (1, T)
    pred_obj = pred[0:1, :]                      # (1, T)
    obj_mask = (gt_obj == 1.0).astype(jnp.float32)
    no_obj_mask = (gt_obj == 0.0).astype(jnp.float32)

    # --- objectness BCEWithLogits (per cell) ---------------------------------
    bce = _bce_with_logits(pred_obj, gt_obj)     # (1, T)

    # --- bbox regression: squared error over 4 coords ------------------------
    pred_xy = jax.nn.sigmoid(pred[1:3, :])       # (2, T)
    pred_wh = jnp.exp(pred[3:5, :])              # (2, T)
    se_xy = (pred_xy - gt[1:3, :]) ** 2
    se_wh = (pred_wh - gt[3:5, :]) ** 2
    bb_sq = (jnp.sum(se_xy, axis=0, keepdims=True)
             + jnp.sum(se_wh, axis=0, keepdims=True))          # (1, T)

    # --- class CE with probability targets (soft labels) ---------------------
    logits = pred[5:, :]                                       # (C, T)
    m = jnp.max(logits, axis=0, keepdims=True)
    z = logits - m
    lse = jnp.log(jnp.sum(jnp.exp(z), axis=0, keepdims=True))  # (1, T)
    ce = jnp.sum(gt[5:, :] * (lse - z), axis=0, keepdims=True)  # -sum t*log_softmax

    zero = jnp.zeros_like(obj_mask)
    contrib = jnp.concatenate([
        obj_mask,               # 0: n_obj
        no_obj_mask,            # 1: n_no_obj
        bce * obj_mask,         # 2: sum bce over obj cells
        bce * no_obj_mask,      # 3: sum bce over no-obj cells
        bb_sq * obj_mask,       # 4: sum squared bbox error over obj cells
        ce * obj_mask,          # 5: sum cross-entropy over obj cells
        zero, zero,             # 6,7: unused padding sublanes
    ], axis=0)                  # (8, T)

    out_ref[...] += contrib[None, :, :]


def yolo_v2_loss(pred, ground_truth):
    B, S1, S2, Dd = pred.shape
    N = B * S1 * S2

    # Channel-major layout: cells on the 128-lane axis (lane-dense compute).
    p = pred.reshape(N, Dd).T            # (D, N)
    g = ground_truth.reshape(N, Dd).T    # (D, N)

    chunk_cells = -(-N // NUM_CHUNKS)
    tile_n = min(MAX_TILE_N, _round_up(chunk_cells, 128))
    tiles_per_chunk = -(-chunk_cells // tile_n)
    n_total = NUM_CHUNKS * tiles_per_chunk * tile_n
    pad = n_total - N
    if pad:
        p = jnp.pad(p, ((0, 0), (0, pad)))
        # Padded cells get objectness -1: excluded from both masks -> zero contribution.
        g = jnp.pad(g, ((0, 0), (0, pad)), constant_values=-1.0)

    in_map = lambda c, i: (0, c * tiles_per_chunk + i)
    out_map = lambda c, i: (c, 0, 0)

    bytes_in = 2 * Dd * n_total * p.dtype.itemsize
    cost = pl.CostEstimate(
        flops=40 * n_total,
        transcendentals=11 * n_total,
        bytes_accessed=bytes_in + NUM_CHUNKS * 8 * tile_n * 4)

    partials = pl.pallas_call(
        yolo_loss_kernel,
        out_shape=jax.ShapeDtypeStruct((NUM_CHUNKS, 8, tile_n), jnp.float32),
        grid=(NUM_CHUNKS, tiles_per_chunk),
        in_specs=[pl.BlockSpec((Dd, tile_n), in_map),
                  pl.BlockSpec((Dd, tile_n), in_map)],
        out_specs=pl.BlockSpec((1, 8, tile_n), out_map),
        compiler_params=pltpu.CompilerParams(
            dimension_semantics=("parallel", "arbitrary"),
            vmem_limit_bytes=32 * 1024 * 1024),
        cost_estimate=cost,
    )(p, g)

    # Tiny finalize in plain JAX: 8 scalars per chunk -> normalizations + lambdas.
    sums = jnp.sum(partials, axis=(0, 2))        # (8,)
    n_obj = sums[0]
    n_no_obj = sums[1]
    obj_loss = sums[2] / n_obj                   # NOTE: NaN if no obj cells, matching PyTorch
    no_obj_loss = sums[3] / n_no_obj
    bb_cord_loss = sums[4] / (n_obj * 4.0)
    class_loss = sums[5] / n_obj
    return (LAMBDA_BB_CORD * bb_cord_loss + LAMBDA_NO_OBJ * no_obj_loss
            + LAMBDA_OBJ * obj_loss + LAMBDA_CLASS * class_loss)


def yolo_v2_loss_ref(pred, gt):
    """Pure-JAX reference mirroring the PyTorch forward exactly."""
    pred = pred.astype(jnp.float32)
    gt = gt.astype(jnp.float32)
    obj_f = (gt[..., 0] == 1.0).astype(jnp.float32)
    no_obj_f = (gt[..., 0] == 0.0).astype(jnp.float32)
    n_obj = jnp.sum(obj_f)
    n_no_obj = jnp.sum(no_obj_f)

    bce = _bce_with_logits(pred[..., 0], gt[..., 0])
    no_obj_loss = jnp.sum(bce * no_obj_f) / n_no_obj
    obj_loss = jnp.sum(bce * obj_f) / n_obj

    pred_bb = jnp.concatenate(
        [jax.nn.sigmoid(pred[..., 1:3]), jnp.exp(pred[..., 3:5])], axis=-1)
    se = (pred_bb - gt[..., 1:5]) ** 2
    bb_loss = jnp.sum(se * obj_f[..., None]) / (n_obj * 4.0)

    log_softmax = jax.nn.log_softmax(pred[..., 5:], axis=-1)
    ce = -jnp.sum(gt[..., 5:] * log_softmax, axis=-1)
    class_loss = jnp.sum(ce * obj_f) / n_obj

    return (LAMBDA_BB_CORD * bb_loss + LAMBDA_NO_OBJ * no_obj_loss
            + LAMBDA_OBJ * obj_loss + LAMBDA_CLASS * class_loss)


if __name__ == "__main__":
    B, S = 2, 8
    key = jax.random.PRNGKey(0)
    k_pred, k_obj, k_bb, k_cls = jax.random.split(key, 4)

    # Predictions: raw network logits.
    pred = jax.random.normal(k_pred, (B, S, S, D), dtype=jnp.float32) * 0.5

    # Ground truth: [objectness in {0,1}, x, y, w, h, one-hot classes].
    obj_bits = jax.random.bernoulli(k_obj, p=0.3, shape=(B, S, S)).astype(jnp.float32)
    # Guarantee at least one object and one empty cell (avoid 0/0, like PyTorch precondition).
    obj_bits = obj_bits.at[0, 0, 0].set(1.0).at[0, 0, 1].set(0.0)
    bb = jax.random.uniform(k_bb, (B, S, S, 4), dtype=jnp.float32,
                            minval=0.05, maxval=1.5)
    cls_idx = jax.random.randint(k_cls, (B, S, S), 0, C)
    cls_onehot = jax.nn.one_hot(cls_idx, C, dtype=jnp.float32)
    ground_truth = jnp.concatenate(
        [obj_bits[..., None], bb, cls_onehot], axis=-1)

    loss = jax.block_until_ready(yolo_v2_loss(pred, ground_truth))
    loss_ref = jax.block_until_ready(yolo_v2_loss_ref(pred, ground_truth))

    assert jnp.isfinite(loss), f"non-finite loss: {loss}"
    assert jnp.allclose(loss, loss_ref, rtol=1e-5, atol=1e-5), (loss, loss_ref)
    print("KERNEL_OK")
</pallas_src>

<mosaic_0001>
module attributes {stable_mosaic.version = 11 : i64} {
  func.func @yolo_loss_kernel(%arg0: i32, %arg1: i32, %arg2: memref<9x128xf32, #tpu.memory_space<vmem>>, %arg3: memref<9x128xf32, #tpu.memory_space<vmem>>, %arg4: memref<1x8x128xf32, #tpu.memory_space<vmem>>) attributes {dimension_semantics = [#tpu.dimension_semantics<parallel>, #tpu.dimension_semantics<arbitrary>], iteration_bounds = array<i64: 2, 1>, scalar_prefetch = 0 : i64, scratch_operands = 0 : i64, tpu.core_type = #tpu.core_type<tc>, window_params = [{transform_indices = @transform_0, window_bounds = array<i64: 9, 128>}, {transform_indices = @transform_1, window_bounds = array<i64: 9, 128>}, {transform_indices = @transform_2, window_bounds = array<i64: 1, 8, 128>}]} {
    %c0_i32 = arith.constant 0 : i32
    %0 = arith.cmpi eq, %arg1, %c0_i32 : i32
    %1 = arith.extui %0 : i1 to i32
    %c0_i32_0 = arith.constant 0 : i32
    %2 = arith.cmpi ne, %1, %c0_i32_0 : i32
    scf.if %2 {
      %cst_21 = arith.constant 0.000000e+00 : f32
      %71 = vector.broadcast %cst_21 : f32 to vector<1x8x128xf32>
      %c0_22 = arith.constant 0 : index
      %c0_23 = arith.constant 0 : index
      %c0_24 = arith.constant 0 : index
      %72 = vector.load %arg4[%c0_22, %c0_23, %c0_24] : memref<1x8x128xf32, #tpu.memory_space<vmem>>, vector<1x8x128xf32>
      tpu.vector_store %arg4[%c0_22, %c0_23, %c0_24], %71 {strides = array<i32>} : memref<1x8x128xf32, #tpu.memory_space<vmem>>, vector<1x8x128xf32>,
    } else {
    }
    %c0 = arith.constant 0 : index
    %c0_1 = arith.constant 0 : index
    %3 = vector.load %arg2[%c0, %c0_1] : memref<9x128xf32, #tpu.memory_space<vmem>>, vector<9x128xf32>
    %c0_2 = arith.constant 0 : index
    %c0_3 = arith.constant 0 : index
    %4 = vector.load %arg3[%c0_2, %c0_3] : memref<9x128xf32, #tpu.memory_space<vmem>>, vector<9x128xf32>
    %5 = vector.extract_strided_slice %4 {offsets = [0, 0], sizes = [1, 128], strides = [1, 1]} : vector<9x128xf32> to vector<1x128xf32>
    %6 = vector.extract_strided_slice %3 {offsets = [0, 0], sizes = [1, 128], strides = [1, 1]} : vector<9x128xf32> to vector<1x128xf32>
    %cst = arith.constant 1.000000e+00 : f32
    %7 = vector.broadcast %cst : f32 to vector<1x128xf32>
    %8 = arith.cmpf oeq, %5, %7 : vector<1x128xf32>
    %9 = arith.extui %8 : vector<1x128xi1> to vector<1x128xi32>
    %10 = arith.sitofp %9 : vector<1x128xi32> to vector<1x128xf32>
    %cst_4 = arith.constant 0.000000e+00 : f32
    %11 = vector.broadcast %cst_4 : f32 to vector<1x128xf32>
    %12 = arith.cmpf oeq, %5, %11 : vector<1x128xf32>
    %13 = arith.extui %12 : vector<1x128xi1> to vector<1x128xi32>
    %14 = arith.sitofp %13 : vector<1x128xi32> to vector<1x128xf32>
    %cst_5 = arith.constant 0.000000e+00 : f32
    %15 = vector.broadcast %cst_5 : f32 to vector<1x128xf32>
    %16 = arith.maximumf %6, %15 : vector<1x128xf32>
    %17 = arith.mulf %6, %5 : vector<1x128xf32>
    %18 = arith.subf %16, %17 : vector<1x128xf32>
    %19 = math.absf %6 : vector<1x128xf32>
    %cst_6 = arith.constant 0.000000e+00 : f32
    %20 = vector.broadcast %cst_6 : f32 to vector<1x128xf32>
    %21 = arith.subf %20, %19 : vector<1x128xf32>
    %22 = math.exp %21 : vector<1x128xf32>
    %cst_7 = arith.constant 1.000000e+00 : f32
    %23 = vector.broadcast %cst_7 : f32 to vector<1x128xf32>
    %24 = arith.addf %23, %22 : vector<1x128xf32>
    %25 = math.log %24 : vector<1x128xf32>
    %26 = arith.addf %18, %25 : vector<1x128xf32>
    %27 = vector.extract_strided_slice %3 {offsets = [1, 0], sizes = [2, 128], strides = [1, 1]} : vector<9x128xf32> to vector<2x128xf32>
    %28 = arith.negf %27 : vector<2x128xf32>
    %29 = math.exp %28 : vector<2x128xf32>
    %cst_8 = arith.constant 1.000000e+00 : f32
    %30 = vector.broadcast %cst_8 : f32 to vector<2x128xf32>
    %31 = arith.addf %30, %29 : vector<2x128xf32>
    %32 = arith.divf %30, %31 : vector<2x128xf32>
    %33 = vector.extract_strided_slice %3 {offsets = [3, 0], sizes = [2, 128], strides = [1, 1]} : vector<9x128xf32> to vector<2x128xf32>
    %34 = math.exp %33 : vector<2x128xf32>
    %35 = vector.extract_strided_slice %4 {offsets = [1, 0], sizes = [2, 128], strides = [1, 1]} : vector<9x128xf32> to vector<2x128xf32>
    %36 = arith.subf %32, %35 : vector<2x128xf32>
    %37 = arith.mulf %36, %36 : vector<2x128xf32>
    %38 = vector.extract_strided_slice %4 {offsets = [3, 0], sizes = [2, 128], strides = [1, 1]} : vector<9x128xf32> to vector<2x128xf32>
    %39 = arith.subf %34, %38 : vector<2x128xf32>
    %40 = arith.mulf %39, %39 : vector<2x128xf32>
    %cst_9 = arith.constant dense<0.000000e+00> : vector<128xf32>
    %41 = vector.multi_reduction <add>, %37, %cst_9 [0] : vector<2x128xf32> to vector<128xf32>
    %42 = vector.shape_cast %41 : vector<128xf32> to vector<1x128xf32>
    %cst_10 = arith.constant dense<0.000000e+00> : vector<128xf32>
    %43 = vector.multi_reduction <add>, %40, %cst_10 [0] : vector<2x128xf32> to vector<128xf32>
    %44 = vector.shape_cast %43 : vector<128xf32> to vector<1x128xf32>
    %45 = arith.addf %42, %44 : vector<1x128xf32>
    %46 = vector.extract_strided_slice %3 {offsets = [5, 0], sizes = [4, 128], strides = [1, 1]} : vector<9x128xf32> to vector<4x128xf32>
    %cst_11 = arith.constant dense<0xFF800000> : vector<128xf32>
    %47 = vector.multi_reduction <maximumf>, %46, %cst_11 [0] : vector<4x128xf32> to vector<128xf32>
    %48 = vector.shape_cast %47 : vector<128xf32> to vector<1x128xf32>
    %49 = vector.broadcast %48 : vector<1x128xf32> to vector<4x128xf32>
    %50 = arith.subf %46, %49 : vector<4x128xf32>
    %51 = math.exp %50 : vector<4x128xf32>
    %cst_12 = arith.constant dense<0.000000e+00> : vector<128xf32>
    %52 = vector.multi_reduction <add>, %51, %cst_12 [0] : vector<4x128xf32> to vector<128xf32>
    %53 = vector.shape_cast %52 : vector<128xf32> to vector<1x128xf32>
    %54 = math.log %53 : vector<1x128xf32>
    %55 = vector.extract_strided_slice %4 {offsets = [5, 0], sizes = [4, 128], strides = [1, 1]} : vector<9x128xf32> to vector<4x128xf32>
    %56 = vector.broadcast %54 : vector<1x128xf32> to vector<4x128xf32>
    %57 = arith.subf %56, %50 : vector<4x128xf32>
    %58 = arith.mulf %55, %57 : vector<4x128xf32>
    %cst_13 = arith.constant dense<0.000000e+00> : vector<128xf32>
    %59 = vector.multi_reduction <add>, %58, %cst_13 [0] : vector<4x128xf32> to vector<128xf32>
    %60 = vector.shape_cast %59 : vector<128xf32> to vector<1x128xf32>
    %cst_14 = arith.constant 0.000000e+00 : f32
    %61 = vector.broadcast %cst_14 : f32 to vector<1x128xf32>
    %62 = arith.mulf %26, %10 : vector<1x128xf32>
    %63 = arith.mulf %26, %14 : vector<1x128xf32>
    %64 = arith.mulf %45, %10 : vector<1x128xf32>
    %65 = arith.mulf %60, %10 : vector<1x128xf32>
    %66 = tpu.concatenate %10, %14, %62, %63, %64, %65, %61, %61 in 0 : vector<1x128xf32>, vector<1x128xf32>, vector<1x128xf32>, vector<1x128xf32>, vector<1x128xf32>, vector<1x128xf32>, vector<1x128xf32>, vector<1x128xf32> -> vector<8x128xf32>
    %c0_15 = arith.constant 0 : index
    %c0_16 = arith.constant 0 : index
    %c0_17 = arith.constant 0 : index
    %67 = vector.load %arg4[%c0_15, %c0_16, %c0_17] : memref<1x8x128xf32, #tpu.memory_space<vmem>>, vector<1x8x128xf32>
    %68 = vector.shape_cast %66 : vector<8x128xf32> to vector<1x8x128xf32>
    %69 = arith.addf %67, %68 : vector<1x8x128xf32>
    %c0_18 = arith.constant 0 : index
    %c0_19 = arith.constant 0 : index
    %c0_20 = arith.constant 0 : index
    %70 = vector.load %arg4[%c0_18, %c0_19, %c0_20] : memref<1x8x128xf32, #tpu.memory_space<vmem>>, vector<1x8x128xf32>
    tpu.vector_store %arg4[%c0_18, %c0_19, %c0_20], %69 {strides = array<i32>} : memref<1x8x128xf32, #tpu.memory_space<vmem>>, vector<1x8x128xf32>,
    return
  }
  func.func @transform_0(%arg0: i32, %arg1: i32) -> (i32, i32) {
    %c1_i32 = arith.constant 1 : i32
    %0 = arith.muli %arg0, %c1_i32 : i32
    %1 = arith.addi %0, %arg1 : i32
    %c0_i32 = arith.constant 0 : i32
    %c0_i32_0 = arith.constant 0 : i32
    return %c0_i32, %1 : i32, i32
  }
  func.func @transform_1(%arg0: i32, %arg1: i32) -> (i32, i32) {
    %c1_i32 = arith.constant 1 : i32
    %0 = arith.muli %arg0, %c1_i32 : i32
    %1 = arith.addi %0, %arg1 : i32
    %c0_i32 = arith.constant 0 : i32
    %c0_i32_0 = arith.constant 0 : i32
    return %c0_i32, %1 : i32, i32
  }
  func.func @transform_2(%arg0: i32, %arg1: i32) -> (i32, i32, i32) {
    %c0_i32 = arith.constant 0 : i32
    %c0_i32_0 = arith.constant 0 : i32
    %c0_i32_1 = arith.constant 0 : i32
    return %arg0, %c0_i32, %c0_i32_0 : i32, i32, i32
  }
}

</mosaic_0001>

<llo_original>
// kernel: tpu_custom_call.1
$region0: #{tpu_custom_call.1}
  #allocation0 [shape = 'u32[]', space=smem, size = 0x4, offset = 0x4, fixed_abs, tag = 'smem constant byte address 0x4 - core index']
  #allocation1 [shape = 'u32[144,128]{1,0:T(1,128)}', space=vmem, size = 0x12000, scoped, tag = 'internal scratch']
  %s0 = inlined_call_operand.hbm [shape: f32[9,256], index: 0, kind: input, shape index: {}]
  %s1 = inlined_call_operand.hbm [shape: f32[9,256], index: 1, kind: input, shape index: {}]
  %s2 = inlined_call_operand.hbm [shape: f32[2,8,128], index: 2, kind: output, shape index: {}]
  %s3 = sld [smem:[#allocation0]]
  $region53: #{tpu_custom_call.1} parent=0
    _
  %s5 = ssub.s32 1, %s3
  %s6 = scalar_select 0, %s5, %s3
  $region1: #{tpu_custom_call.1} parent=0
    #allocation2 [shape = 'u8[16384]{0}', space=vmem, size = 0x4000, scoped, tag = 'input window, operand 0']
    #allocation3 [shape = 's32[2]{0}', space=sflag, size = 0x8, scoped, tag = 'scoped memory for tpu_custom_call.1']
    #allocation4 [shape = 's32[2]{0}', space=sflag, size = 0x8, scoped, tag = 'scoped memory for tpu_custom_call.1']
    #allocation5 [shape = 'u8[16384]{0}', space=vmem, size = 0x4000, scoped, tag = 'input window, operand 1']
    #allocation6 [shape = 's32[2]{0}', space=sflag, size = 0x8, scoped, tag = 'scoped memory for tpu_custom_call.1']
    #allocation7 [shape = 'u8[8192]{0}', space=vmem, size = 0x2000, scoped, tag = 'output window, operand 0']
    %7 = vsyncpa [#allocation3], 0
    %s8 = scalar_lea.sflag [#allocation3], 1
    %9 = vsyncpa %s8, 0
    %10 = vsyncpa [#allocation6], 0
    %s11 = scalar_lea.sflag [#allocation6], 1
    %12 = vsyncpa %s11, 0
    %13 = vsyncpa [#allocation4], 0
    %s14 = scalar_lea.sflag [#allocation4], 1
    %15 = vsyncpa %s14, 0
    loop: start=0, step=1, limit=4
    $region2: #{tpu_custom_call.1} parent=1 // loop_pre_header
      _
    $region3: #{tpu_custom_call.1} parent=1 // loop_header
      %s17 = sphi 0, %s21
      %p18 = scmp.ge.s32.totalorder %s17, 4
      %s24 = sphi 0, %s36
      %s25 = sphi 0, %s32
      %s26 = sphi 0, %s24
      %s27 = sphi 0, %s25
      %s28 = sphi 0, %s26
      %s29 = sphi 0, %s27
      %s41 = sphi 0, %s43
      %s44 = sphi 0, %s41
      %s45 = sphi 0, %s44
      %s61 = sphi 0, %s45
      %s69 = sphi 0, %s71
      %s72 = sphi 0, %s69
      %s73 = sphi 0, %s72
      %s89 = sphi 0, %s73
      %s95 = sphi 0, %s97
      %s98 = sphi 0, %s95
      %s99 = sphi 0, %s98
      %s115 = sphi 0, %s99
    $region4: #{tpu_custom_call.1} parent=1 // loop_header_branch
      %20 = sbr.rel (%p18) target = $region8
    $region5: #{tpu_custom_call.1} parent=1 // loop_body
      %s22 = ssub.s32 %s17, 1
      %s23 = ssub.s32 %s17, 2
      %s30 = sadd.s32 1, %s25
      %p31 = scmp.ge.s32.totalorder %s30, 1
      %s32 = scalar_select %p31, 0, %s30
      %s33 = sadd.s32 1, %s24
      %s34 = scalar_select %p31, %s33, %s24
      %p35 = scmp.ge.s32.totalorder %s34, 2
      %s36 = scalar_select %p35, 0, %s34
      %s37 = sadd.s32 %s24, %s25
      %s38 = sadd.s32 %s36, %s32
      %s39 = ssub.s32 %s37, %s38
      %p40 = scmp.eq.s32.totalorder %s39, 0
      %s42 = sadd.s32 %s41, 1
      %s43 = scalar_select %p40, %s41, %s42
      %p46 = pneg %p40
      %p47 = scmp.eq.s32.totalorder %s17, 1
      %p48 = por %p46, %p47
      %p49 = scmp.ne.s32.totalorder %s41, %s44
      %p50 = scmp.eq.s32.totalorder %s17, 0
      %p51 = por %p49, %p50
      %p52 = scmp.ne.s32.totalorder %s41, %s44
      %p53 = scmp.eq.s32.totalorder %s22, 1
      %p54 = por %p52, %p53
      %p55 = scmp.ne.s32.totalorder %s44, %s45
      %p56 = scmp.eq.s32.totalorder %s22, 0
      %p57 = por %p55, %p56
      %p58 = scmp.ne.s32.totalorder %s44, %s45
      %p59 = scmp.eq.s32.totalorder %s23, 1
      %p60 = por %p58, %p59
      %p62 = scmp.ne.s32.totalorder %s45, %s61
      %p63 = scmp.eq.s32.totalorder %s23, 0
      %p64 = por %p62, %p63
      %s65 = sadd.s32 %s24, %s25
      %s66 = sadd.s32 %s36, %s32
      %s67 = ssub.s32 %s65, %s66
      %p68 = scmp.eq.s32.totalorder %s67, 0
      %s70 = sadd.s32 %s69, 1
      %s71 = scalar_select %p68, %s69, %s70
      %p74 = pneg %p68
      %p75 = scmp.eq.s32.totalorder %s17, 1
      %p76 = por %p74, %p75
      %p77 = scmp.ne.s32.totalorder %s69, %s72
      %p78 = scmp.eq.s32.totalorder %s17, 0
      %p79 = por %p77, %p78
      %p80 = scmp.ne.s32.totalorder %s69, %s72
      %p81 = scmp.eq.s32.totalorder %s22, 1
      %p82 = por %p80, %p81
      %p83 = scmp.ne.s32.totalorder %s72, %s73
      %p84 = scmp.eq.s32.totalorder %s22, 0
      %p85 = por %p83, %p84
      %p86 = scmp.ne.s32.totalorder %s72, %s73
      %p87 = scmp.eq.s32.totalorder %s23, 1
      %p88 = por %p86, %p87
      %p90 = scmp.ne.s32.totalorder %s73, %s89
      %p91 = scmp.eq.s32.totalorder %s23, 0
      %p92 = por %p90, %p91
      %s93 = ssub.s32 %s24, %s36
      %p94 = scmp.eq.s32.totalorder %s93, 0
      %s96 = sadd.s32 %s95, 1
      %s97 = scalar_select %p94, %s95, %s96
      %p100 = pneg %p94
      %p101 = scmp.eq.s32.totalorder %s17, 1
      %p102 = por %p100, %p101
      %p103 = scmp.ne.s32.totalorder %s95, %s98
      %p104 = scmp.eq.s32.totalorder %s17, 0
      %p105 = por %p103, %p104
      %p106 = scmp.ne.s32.totalorder %s95, %s98
      %p107 = scmp.eq.s32.totalorder %s22, 1
      %p108 = por %p106, %p107
      %p109 = scmp.ne.s32.totalorder %s98, %s99
      %p110 = scmp.eq.s32.totalorder %s22, 0
      %p111 = por %p109, %p110
      %p112 = scmp.ne.s32.totalorder %s98, %s99
      %p113 = scmp.eq.s32.totalorder %s23, 1
      %p114 = por %p112, %p113
      %p116 = scmp.ne.s32.totalorder %s99, %s115
      %p117 = scmp.eq.s32.totalorder %s23, 0
      %p118 = por %p116, %p117
      %p119 = scmp.le.s32.totalorder 1, %s17
      %p120 = scmp.lt.s32.totalorder %s17, 3
      %p121 = pnand %p119, %p120
      %p122 = pneg %p121
      // Predicated region
      $region9: #{tpu_custom_call.1} parent=5 // pred_check
        _
      $region10: #{tpu_custom_call.1} parent=5 // pred_check_branch
        %124 = sbr.rel (%p121) target = $region12
      $region11: #{tpu_custom_call.1} parent=5 // pred_region
        %s125 = ssub.s32 %s17, 1
      $region12: #{tpu_custom_call.1} parent=5 // pred_fallthru
        _
      %p126 = scmp.lt.s32.totalorder %s17, 2
      // Predicated region
      $region13: #{tpu_custom_call.1} parent=5 // pred_check
        %p127 = pneg %p126
      $region14: #{tpu_custom_call.1} parent=5 // pred_check_branch
        %129 = sbr.rel (%p127) target = $region16
      $region15: #{tpu_custom_call.1} parent=5 // pred_region
        // Predicated region
        $region17: #{tpu_custom_call.1} parent=15 // pred_check
          %p130 = pneg %p51
        $region18: #{tpu_custom_call.1} parent=15 // pred_check_branch
          %132 = sbr.rel (%p130) target = $region20
        $region19: #{tpu_custom_call.1} parent=15 // pred_region
          %s133 = sand.u32 %s41, 1
          %s134 = scalar_lea.sflag [#allocation3], %s133
          %s135 = sand.u32 %s41, 1
          %s136 = smul.addr %s135, 16
          %s137 = scalar_lea.vmem [#allocation2], %s136
          %s138 = sadd.s32 %s24, %s25
          %s140 = ssub.s32 256, 256
          %141 = vsyncadd %s134, %s140
          %s142 = smul.addr %s138, 128
          %s143 = scalar_lea.hbm %s0, %s142
          %s144 = sshll.u32 %s137, 4
          %s145 = int_to_ptr.vmem [resolvable:$true] %s144
          %150 = dma.hbm_to_vmem [thread:$0]  %s143, 256, %s145, %s134, 256, 128, 8
        $region20: #{tpu_custom_call.1} parent=15 // pred_fallthru
          _
        // Predicated region
        $region21: #{tpu_custom_call.1} parent=15 // pred_check
          %p151 = pneg %p79
        $region22: #{tpu_custom_call.1} parent=15 // pred_check_branch
          %153 = sbr.rel (%p151) target = $region24
        $region23: #{tpu_custom_call.1} parent=15 // pred_region
          %s154 = sand.u32 %s69, 1
          %s155 = scalar_lea.sflag [#allocation6], %s154
          %s156 = sand.u32 %s69, 1
          %s157 = smul.addr %s156, 16
          %s158 = scalar_lea.vmem [#allocation5], %s157
          %s159 = sadd.s32 %s24, %s25
          %s161 = ssub.s32 256, 256
          %162 = vsyncadd %s155, %s161
          %s163 = smul.addr %s159, 128
          %s164 = scalar_lea.hbm %s1, %s163
          %s165 = sshll.u32 %s158, 4
          %s166 = int_to_ptr.vmem [resolvable:$true] %s165
          %171 = dma.hbm_to_vmem [thread:$0]  %s164, 256, %s166, %s155, 256, 128, 8
        $region24: #{tpu_custom_call.1} parent=15 // pred_fallthru
          _
      $region16: #{tpu_custom_call.1} parent=5 // pred_fallthru
        _
      %p172 = scmp.le.s32.totalorder 1, %s17
      %p173 = scmp.lt.s32.totalorder %s17, 3
      %p174 = pnand %p172, %p173
      %p175 = pneg %p174
      // Predicated region
      $region25: #{tpu_custom_call.1} parent=5 // pred_check
        _
      $region26: #{tpu_custom_call.1} parent=5 // pred_check_branch
        %177 = sbr.rel (%p174) target = $region28
      $region27: #{tpu_custom_call.1} parent=5 // pred_region
        %s178 = ssub.s32 %s17, 1
        %s179 = sand.u32 %s44, 1
        %s180 = scalar_lea.sflag [#allocation3], %s179
        %s181 = sand.u32 %s44, 1
        %s182 = smul.addr %s181, 16
        %s183 = scalar_lea.vmem [#allocation2], %s182
        // Predicated region
        $region29: #{tpu_custom_call.1} parent=27 // pred_check
          %p184 = pneg %p57
        $region30: #{tpu_custom_call.1} parent=27 // pred_check_branch
          %186 = sbr.rel (%p184) target = $region32
        $region31: #{tpu_custom_call.1} parent=27 // pred_region
          %187 = dma.done %s180, 256
        $region32: #{tpu_custom_call.1} parent=27 // pred_fallthru
          _
        %s188 = sand.u32 %s72, 1
        %s189 = scalar_lea.sflag [#allocation6], %s188
        %s190 = sand.u32 %s72, 1
        %s191 = smul.addr %s190, 16
        %s192 = scalar_lea.vmem [#allocation5], %s191
        // Predicated region
        $region33: #{tpu_custom_call.1} parent=27 // pred_check
          %p193 = pneg %p85
        $region34: #{tpu_custom_call.1} parent=27 // pred_check_branch
          %195 = sbr.rel (%p193) target = $region36
        $region35: #{tpu_custom_call.1} parent=27 // pred_region
          %196 = dma.done %s189, 256
        $region36: #{tpu_custom_call.1} parent=27 // pred_fallthru
          _
        %s197 = sand.u32 %s44, 1
        %s198 = scalar_lea.sflag [#allocation3], %s197
        %s199 = sand.u32 %s44, 1
        %s200 = smul.addr %s199, 16
        %s201 = scalar_lea.vmem [#allocation2], %s200
        %p202 = pneg %p57
        %p203 = pneg %p54
        %s204 = sand.u32 %s72, 1
        %s205 = scalar_lea.sflag [#allocation6], %s204
        %s206 = sand.u32 %s72, 1
        %s207 = smul.addr %s206, 16
        %s208 = scalar_lea.vmem [#allocation5], %s207
        %p209 = pneg %p85
        %p210 = pneg %p82
        %p211 = pneg %p111
        %p212 = pneg %p108
        %s213 = sand.u32 %s98, 1
        %s214 = scalar_lea.sflag [#allocation4], %s213
        %s215 = sand.u32 %s98, 1
        %s216 = smul.addr %s215, 8
        %s217 = scalar_lea.vmem [#allocation7], %s216
        %s218 = sadd.s32 %s26, %s27
        %s219 = sadd.s32 %s26, %s27
        %p220 = scmp.eq.s32.totalorder %s27, 0
        // Predicated region
        $region37: #{tpu_custom_call.1} parent=27 // pred_check
          %p221 = pneg %p220
        $region38: #{tpu_custom_call.1} parent=27 // pred_check_branch
          %223 = sbr.rel (%p221) target = $region40
        $region39: #{tpu_custom_call.1} parent=27 // pred_region
          %224 = vst [vmem:[%s217] sm:$0xff] 0.0
        $region40: #{tpu_custom_call.1} parent=27 // pred_fallthru
          _
        %v225 = vld [vmem:[%s183] sm:$0xff]
        %v226 = vld [vmem:[%s183 + $0x8] sm:$0x1]
        %v227 = vld [vmem:[%s192] sm:$0xff]
        %v228 = vld [vmem:[%s192 + $0x8] sm:$0x1]
        %vm229 = vcmp.eq.f32.partialorder %v227, 1.0
        %v230 = vsel %vm229, 1, 0
        %v231 = vcvt.s32.f32 %v230
        %vm232 = vcmp.eq.f32.partialorder %v227, 0.0
        %v233 = vsel %vm232, 1, 0
        %v234 = vcvt.s32.f32 %v233
        %v235 = vmax.f32 %v225, 0.0
        %v236 = vmul.f32 %v225, %v227
        %v237 = vsub.f32 %v235, %v236
        %v238 = vand.u32 2147483647, %v225
        %v239 = vsub.f32 0.0, %v238
        %v240 = vmul.f32 %v239, 1.442695
        %v241 = vpow.pop %v240
        %v242 = vadd.f32 %v241, 1.0
        %v243 = vlog2.pop %v242
        %v244 = vmul.f32 %v243, 0.6931472
        %v245 = vadd.f32 %v237, %v244
        %v246 = vxor.u32 %v225, 2147483648
        %v247 = vmul.f32 %v246, 1.442695
        %v248 = vpow.pop %v247
        %v249 = vadd.f32 %v248, 1.0
        %v250 = vrcp.pop %v249
        %v251 = vmul.f32 1.0, %v250
        %v252 = vmul.f32 %v225, 1.442695
        %v253 = vpow.pop %v252
        %v254 = vsub.f32 %v251, %v227
        %v255 = vmul.f32 %v254, %v254
        %v256 = vsub.f32 %v253, %v227
        %v257 = vmul.f32 %v256, %v256
        %v259 = vrot.slane %v255, 1
        %vm261 = vcmask 1041408
        %v262 = vsel %vm261, %v259, 0.0
        %v263 = vrot.slane %v262, 4
        %v264 = vadd.f32 %v262, %v263
        %v265 = vrot.slane %v264, 2
        %v266 = vadd.f32 %v264, %v265
        %v267 = vrot.slane %v266, 1
        %v268 = vadd.f32 %v266, %v267
        %v270 = vrot.slane %v257, 3
        %v272 = vsel %vm261, %v270, 0.0
        %v273 = vrot.slane %v272, 4
        %v274 = vadd.f32 %v272, %v273
        %v275 = vrot.slane %v274, 2
        %v276 = vadd.f32 %v274, %v275
        %v277 = vrot.slane %v276, 1
        %v278 = vadd.f32 %v276, %v277
        %v279 = vadd.f32 %v268, %v278
        %vm280 = vcmask 1047557
        %v281 = vsel %vm280, %v225, -inf
        %vm282 = vcmask 1040384
        %v283 = vsel %vm282, %v226, -inf
        %v284 = vmax.f32 %v281, %v283
        %v285 = vrot.slane %v284, 4
        %v286 = vmax.f32 %v284, %v285
        %v287 = vrot.slane %v286, 2
        %v288 = vmax.f32 %v286, %v287
        %v289 = vrot.slane %v288, 1
        %v290 = vmax.f32 %v288, %v289
        %v291 = vsub.f32 %v225, %v290
        %v292 = vsub.f32 %v226, %v290
        %v293 = vmul.f32 %v291, 1.442695
        %v294 = vpow.pop %v293
        %v295 = vmul.f32 %v292, 1.442695
        %v296 = vpow.pop %v295
        %vm299 = vcmask 1042432
        %v300 = vrot.slane %v294, 5
        %v301 = vrot.slane %v296, 5
        %v302 = vsel %vm299, %v300, %v301
        %vm304 = vcmask 1043456
        %v305 = vsel %vm304, %v302, 0.0
        %v306 = vrot.slane %v305, 4
        %v307 = vadd.f32 %v305, %v306
        %v308 = vrot.slane %v307, 2
        %v309 = vadd.f32 %v307, %v308
        %v310 = vrot.slane %v309, 1
        %v311 = vadd.f32 %v309, %v310
        %v312 = vlog2.pop %v311
        %v313 = vmul.f32 %v312, 0.6931472
        %v314 = vsub.f32 %v313, %v291
        %v315 = vsub.f32 %v313, %v292
        %v316 = vmul.f32 %v227, %v314
        %v317 = vmul.f32 %v228, %v315
        %v320 = vrot.slane %v316, 5
        %v321 = vrot.slane %v317, 5
        %v322 = vsel %vm299, %v320, %v321
        %v324 = vsel %vm304, %v322, 0.0
        %v325 = vrot.slane %v324, 4
        %v326 = vadd.f32 %v324, %v325
        %v327 = vrot.slane %v326, 2
        %v328 = vadd.f32 %v326, %v327
        %v329 = vrot.slane %v328, 1
        %v330 = vadd.f32 %v328, %v329
        %v331 = vmul.f32 %v245, %v231
        %v332 = vmul.f32 %v245, %v234
        %v333 = vmul.f32 %v279, %v231
        %v334 = vmul.f32 %v330, %v231
        %v336 = vrot.slane %v234, 7
        %v339 = vrot.slane %v331, 6
        %v342 = vrot.slane %v332, 5
        %v345 = vrot.slane %v333, 4
        %v348 = vrot.slane %v334, 3
        %v350 = vsel %vm282, %v231, %v336
        %v351 = vsel %vm261, %v350, %v339
        %v352 = vsel %vm299, %v351, %v342
        %v353 = vsel %vm304, %v352, %v345
        %vm354 = vcmask 1044480
        %v355 = vsel %vm354, %v353, %v348
        %vm356 = vcmask 1045504
        %v357 = vsel %vm356, %v355, 0.0
        %vm358 = vcmask 1046528
        %v359 = vsel %vm358, %v357, 0.0
        %v360 = vld [vmem:[%s217] sm:$0xff]
        %v361 = vadd.f32 %v360, %v359
        %362 = vst [vmem:[%s217] sm:$0xff] %v361
        %s363 = sand.u32 %s98, 1
        %s364 = scalar_lea.sflag [#allocation4], %s363
        %s365 = sand.u32 %s98, 1
        %s366 = smul.addr %s365, 8
        %s367 = scalar_lea.vmem [#allocation7], %s366
        // Predicated region
        $region41: #{tpu_custom_call.1} parent=27 // pred_check
          %p368 = pneg %p108
        $region42: #{tpu_custom_call.1} parent=27 // pred_check_branch
          %370 = sbr.rel (%p368) target = $region44
        $region43: #{tpu_custom_call.1} parent=27 // pred_region
          %s372 = ssub.s32 128, 128
          %373 = vsyncadd %s364, %s372
          %s374 = smul.addr %s26, 128
          %s375 = scalar_lea.hbm %s2, %s374
          %s377 = sshll.u32 %s367, 4
          %s378 = int_to_ptr.vmem [resolvable:$true] %s377
          %380 = dma.vmem_to_hbm [thread:$0]  %s378, 128, %s375, %s364
        $region44: #{tpu_custom_call.1} parent=27 // pred_fallthru
          _
      $region28: #{tpu_custom_call.1} parent=5 // pred_fallthru
        _
      %p381 = scmp.le.s32.totalorder 2, %s17
      // Predicated region
      $region45: #{tpu_custom_call.1} parent=5 // pred_check
        %p382 = pneg %p381
      $region46: #{tpu_custom_call.1} parent=5 // pred_check_branch
        %384 = sbr.rel (%p382) target = $region48
      $region47: #{tpu_custom_call.1} parent=5 // pred_region
        %s385 = ssub.s32 %s17, 2
        // Predicated region
        $region49: #{tpu_custom_call.1} parent=47 // pred_check
          %p386 = pneg %p114
        $region50: #{tpu_custom_call.1} parent=47 // pred_check_branch
          %388 = sbr.rel (%p386) target = $region52
        $region51: #{tpu_custom_call.1} parent=47 // pred_region
          %s389 = sand.u32 %s99, 1
          %s390 = scalar_lea.sflag [#allocation4], %s389
          %s391 = sand.u32 %s99, 1
          %s392 = smul.addr %s391, 8
          %s393 = scalar_lea.vmem [#allocation7], %s392
          %394 = dma.done %s390, 128
        $region52: #{tpu_custom_call.1} parent=47 // pred_fallthru
          _
      $region48: #{tpu_custom_call.1} parent=5 // pred_fallthru
        _
    $region6: #{tpu_custom_call.1} parent=1 // loop_footer
      %s21 = sadd.s32 1, %s17
    $region7: #{tpu_custom_call.1} parent=1 // loop_footer_branch
      %16 = sbr.rel target = $region3
    $region8: #{tpu_custom_call.1} parent=1 // loop_exit
      _
    %395 = vsyncpa [#allocation3], 1
    %s396 = scalar_lea.sflag [#allocation3], 1
    %397 = vsyncpa %s396, 1
    %398 = vsyncpa [#allocation6], 1
    %s399 = scalar_lea.sflag [#allocation6], 1
    %400 = vsyncpa %s399, 1
    %401 = vsyncpa [#allocation4], 1
    %s402 = scalar_lea.sflag [#allocation4], 1
    %403 = vsyncpa %s402, 1

</llo_original>
